<compile_context>
chip_gen: v7x
topology: tpu7x:2x2x1
jax: 0.10.0
libtpu: 0.0.40
codegen_flags: <defaults>
</compile_context>

<pallas_src>
import functools

import jax
import jax.numpy as jnp
from jax import lax
from jax.experimental import pallas as pl
from jax.experimental.pallas import tpu as pltpu

_LANES = 128
_ROW_ALIGN = 32                      # sublane alignment covering f32/bf16/int8 packing
_VMEM_LIMIT = 32 * 1024 * 1024       # requested scoped VMEM (safe on v5e/v6e/v7x)
_VMEM_BUDGET = 24 * 1024 * 1024      # conservative per-step estimate must stay under this


def _cdiv(a, b):
    return (a + b - 1) // b


def _round_up(x, m):
    return _cdiv(x, m) * m


def _focal_loss_tile_kernel(alpha_ref, x_ref, t_ref, out_ref, *,
                            n, num_classes, gamma, gamma_is_int):
    # alpha_ref: SMEM (C,) f32 per-class weights
    # x_ref:     (C, rows, 128) logits (native dtype); batch on (sublane, lane)
    # t_ref:     (rows, 128) narrow-int target class ids
    # out_ref:   (1, 128) f32 per-lane partial loss sums for this tile
    x = x_ref[...].astype(jnp.float32)            # (C, rows, 128)
    t = t_ref[...].astype(jnp.int32)              # (rows, 128)
    rows = t.shape[0]

    # Gather x[target] and alpha[target] with selects (no f32 one-hot mask).
    x_t = jnp.zeros(t.shape, jnp.float32)
    w = jnp.zeros(t.shape, jnp.float32)
    for cls in range(num_classes):
        pred = t == cls
        x_t = jnp.where(pred, x[cls], x_t)
        w = jnp.where(pred, alpha_ref[cls], w)

    # Zero out the padded tail; n is a compile-time constant baked in here.
    row0 = pl.program_id(0) * rows
    gidx = ((lax.broadcasted_iota(jnp.int32, t.shape, 0) + row0) * _LANES
            + lax.broadcasted_iota(jnp.int32, t.shape, 1))
    valid = gidx < n

    # Log-softmax over the small, static class axis (element-wise VPU/EUP ops).
    m = x[0]
    for cls in range(1, num_classes):
        m = jnp.maximum(m, x[cls])
    s = jnp.exp(x[0] - m)
    for cls in range(1, num_classes):
        s = s + jnp.exp(x[cls] - m)
    log_p = x_t - m - jnp.log(s)                  # finite; no divide, no log(0)
    p = jnp.exp(log_p)
    one_minus_p = jnp.maximum(1.0 - p, 0.0)

    if gamma_is_int:
        g = int(gamma)
        focal = jnp.ones_like(one_minus_p) if g == 0 else lax.integer_pow(one_minus_p, g)
    else:
        focal = jnp.power(jnp.maximum(one_minus_p, 1e-38), jnp.float32(gamma))

    loss = jnp.where(valid, -(w * focal) * log_p, 0.0)     # (rows, 128)
    out_ref[...] = jnp.sum(loss, axis=0, keepdims=True)    # (1, 128)


def focal_loss(inputs, targets, alpha=None, gamma=2.0, size_average=True):
    """Focal loss matching the torch module. inputs: (N, C) logits; targets: (N,) ints."""
    n, c = inputs.shape

    if alpha is None:
        alpha = jnp.ones((c,), dtype=jnp.float32)
    alpha = jnp.asarray(alpha, dtype=jnp.float32).reshape(-1)   # accepts (C,) or (C, 1)

    # Narrow target dtype (perf review): fewer HBM bytes on a mem-bound kernel.
    if c <= 127:
        t_dtype = jnp.int8
    elif c <= 32767:
        t_dtype = jnp.int16
    else:
        t_dtype = jnp.int32
    targets = targets.astype(t_dtype)

    in_itemsize = jnp.dtype(inputs.dtype).itemsize
    t_itemsize = jnp.dtype(t_dtype).itemsize

    # ---- tile planning: batch axis -> (rows, 128) lane-dense slabs ----
    total_rows = _cdiv(n, _LANES)
    # Conservative per-column VMEM estimate: double-buffered inputs + the f32
    # copy of x + ~8 live f32 row-temporaries.
    bytes_per_col = 2 * (c * in_itemsize + t_itemsize) + (c + 8) * 4
    rows_cap = max(_ROW_ALIGN,
                   (_VMEM_BUDGET // (_LANES * bytes_per_col)) // _ROW_ALIGN * _ROW_ALIGN)

    if total_rows < 2 * _ROW_ALIGN:
        # Tiny batch: a single tile covering the full (possibly unaligned) extent.
        rows_per_tile, num_tiles = total_rows, 1
    else:
        # >= 2 tiles so both v7x TensorCores get work; size tiles from
        # cdiv(rows, num_tiles) so padding stays bounded (~_ROW_ALIGN per tile).
        num_tiles = max(2, _cdiv(total_rows, rows_cap))
        rows_per_tile = _round_up(_cdiv(total_rows, num_tiles), _ROW_ALIGN)
        num_tiles = _cdiv(total_rows, rows_per_tile)

    r_pad = num_tiles * rows_per_tile
    n_pad = r_pad * _LANES
    pad = n_pad - n

    # One fused layout pass (transpose + pad + reshape -> a single XLA copy).
    # TODO(synk): emit (C, N)-major logits from the producer to drop this pass.
    x_slab = jnp.pad(inputs.T, ((0, 0), (0, pad))).reshape(c, r_pad, _LANES)
    t_slab = jnp.pad(targets, (0, pad)).reshape(r_pad, _LANES)

    kernel = functools.partial(
        _focal_loss_tile_kernel,
        n=n,
        num_classes=c,
        gamma=float(gamma),
        gamma_is_int=float(gamma).is_integer(),
    )

    partials = pl.pallas_call(
        kernel,
        out_shape=jax.ShapeDtypeStruct((1, num_tiles * _LANES), jnp.float32),
        grid=(num_tiles,),
        in_specs=[
            pl.BlockSpec(memory_space=pltpu.MemorySpace.SMEM),               # alpha (C,)
            pl.BlockSpec((c, rows_per_tile, _LANES), lambda i: (0, i, 0)),   # logits slab
            pl.BlockSpec((rows_per_tile, _LANES), lambda i: (i, 0)),         # targets slab
        ],
        out_specs=pl.BlockSpec((1, _LANES), lambda i: (0, i)),
        compiler_params=pltpu.CompilerParams(
            dimension_semantics=("parallel",),
            vmem_limit_bytes=_VMEM_LIMIT,
        ),
    )(alpha, x_slab, t_slab)

    total = jnp.sum(partials)     # padded lanes were zeroed in-kernel
    if size_average:
        return total / jnp.float32(n)
    return total


def _focal_loss_ref(inputs, targets, alpha, gamma, size_average):
    # pure-JAX reference (matches the torch module semantics)
    x = inputs.astype(jnp.float32)
    p = jax.nn.softmax(x, axis=-1)
    probs = jnp.take_along_axis(p, targets[:, None].astype(jnp.int32), axis=1)
    a = alpha.reshape(-1)[targets.astype(jnp.int32)][:, None]
    bl = -a * (1.0 - probs) ** gamma * jnp.log(probs)
    return jnp.mean(bl) if size_average else jnp.sum(bl)


if __name__ == "__main__":
    key = jax.random.PRNGKey(0)
    k1, k2, k3, k4, k5 = jax.random.split(key, 5)

    # Small default-config check: class_num=2, alpha=None, gamma=2, mean reduction.
    N, C = 8, 2
    inputs = jax.random.normal(k1, (N, C), dtype=jnp.float32)
    targets = jax.random.randint(k2, (N,), 0, C, dtype=jnp.int32)
    loss = jax.block_until_ready(focal_loss(inputs, targets, gamma=2.0, size_average=True))
    ref = _focal_loss_ref(inputs, targets, jnp.ones((C,), jnp.float32), 2.0, True)
    assert jnp.allclose(loss, ref, rtol=1e-5, atol=1e-6), (loss, ref)

    # Non-uniform alpha, sum reduction, non-integer gamma path.
    alpha = jax.random.uniform(k3, (C,), dtype=jnp.float32) + 0.25
    loss2 = jax.block_until_ready(
        focal_loss(inputs, targets, alpha=alpha, gamma=1.5, size_average=False))
    ref2 = _focal_loss_ref(inputs, targets, alpha, 1.5, False)
    assert jnp.allclose(loss2, ref2, rtol=1e-4, atol=1e-5), (loss2, ref2)

    # Multi-tile path: exercises >=2 parallel tiles, int8 targets, in-kernel
    # class/alpha selects and the padded-tail valid mask.
    N2, C2 = 20000, 3
    inputs2 = jax.random.normal(k4, (N2, C2), dtype=jnp.float32)
    targets2 = jax.random.randint(k5, (N2,), 0, C2, dtype=jnp.int32)
    alpha2 = jnp.asarray([0.25, 1.0, 2.0], jnp.float32)
    loss3 = jax.block_until_ready(
        focal_loss(inputs2, targets2, alpha=alpha2, gamma=2.0, size_average=True))
    ref3 = _focal_loss_ref(inputs2, targets2, alpha2, 2.0, True)
    assert jnp.allclose(loss3, ref3, rtol=1e-4, atol=1e-5), (loss3, ref3)

    print("KERNEL_OK")
</pallas_src>

<mosaic_0001>
module attributes {stable_mosaic.version = 11 : i64} {
  func.func @_focal_loss_tile_kernel(%arg0: i32, %arg1: memref<2xf32, #tpu.memory_space<smem>>, %arg2: memref<2x1x128xf32, #tpu.memory_space<vmem>>, %arg3: memref<1x128xi8, #tpu.memory_space<vmem>>, %arg4: memref<1x128xf32, #tpu.memory_space<vmem>>) attributes {dimension_semantics = [#tpu.dimension_semantics<parallel>], iteration_bounds = array<i64: 1>, scalar_prefetch = 0 : i64, scratch_operands = 0 : i64, tpu.core_type = #tpu.core_type<tc>, window_params = [{transform_indices = @transform_0, window_bounds = array<i64: 2>}, {transform_indices = @transform_1, window_bounds = array<i64: 2, 1, 128>}, {transform_indices = @transform_2, window_bounds = array<i64: 1, 128>}, {transform_indices = @transform_3, window_bounds = array<i64: 1, 128>}]} {
    %c0 = arith.constant 0 : index
    %c0_0 = arith.constant 0 : index
    %c0_1 = arith.constant 0 : index
    %0 = vector.load %arg2[%c0, %c0_0, %c0_1] : memref<2x1x128xf32, #tpu.memory_space<vmem>>, vector<2x1x128xf32>
    %c0_2 = arith.constant 0 : index
    %c0_3 = arith.constant 0 : index
    %1 = vector.load %arg3[%c0_2, %c0_3] : memref<1x128xi8, #tpu.memory_space<vmem>>, vector<1x128xi8>
    %2 = arith.extsi %1 : vector<1x128xi8> to vector<1x128xi32>
    %cst = arith.constant 0.000000e+00 : f32
    %3 = vector.broadcast %cst : f32 to vector<1x128xf32>
    %cst_4 = arith.constant 0.000000e+00 : f32
    %4 = vector.broadcast %cst_4 : f32 to vector<1x128xf32>
    %c0_i32 = arith.constant 0 : i32
    %5 = vector.broadcast %c0_i32 : i32 to vector<1x128xi32>
    %6 = arith.cmpi eq, %2, %5 : vector<1x128xi32>
    %7 = vector.extract_strided_slice %0 {offsets = [0, 0, 0], sizes = [1, 1, 128], strides = [1, 1, 1]} : vector<2x1x128xf32> to vector<1x1x128xf32>
    %8 = vector.shape_cast %7 : vector<1x1x128xf32> to vector<1x128xf32>
    %9 = arith.select %6, %8, %3 : vector<1x128xi1>, vector<1x128xf32>
    %c0_5 = arith.constant 0 : index
    %10 = memref.load %arg1[%c0_5] : memref<2xf32, #tpu.memory_space<smem>>
    %11 = vector.broadcast %10 : f32 to vector<1x128xf32>
    %12 = arith.select %6, %11, %4 : vector<1x128xi1>, vector<1x128xf32>
    %c1_i32 = arith.constant 1 : i32
    %13 = vector.broadcast %c1_i32 : i32 to vector<1x128xi32>
    %14 = arith.cmpi eq, %2, %13 : vector<1x128xi32>
    %15 = vector.extract_strided_slice %0 {offsets = [1, 0, 0], sizes = [1, 1, 128], strides = [1, 1, 1]} : vector<2x1x128xf32> to vector<1x1x128xf32>
    %16 = vector.shape_cast %15 : vector<1x1x128xf32> to vector<1x128xf32>
    %17 = arith.select %14, %16, %9 : vector<1x128xi1>, vector<1x128xf32>
    %c1 = arith.constant 1 : index
    %18 = memref.load %arg1[%c1] : memref<2xf32, #tpu.memory_space<smem>>
    %19 = vector.broadcast %18 : f32 to vector<1x128xf32>
    %20 = arith.select %14, %19, %12 : vector<1x128xi1>, vector<1x128xf32>
    %c1_i32_6 = arith.constant 1 : i32
    %21 = arith.muli %arg0, %c1_i32_6 : i32
    %22 = tpu.iota {dimensions = array<i32: 0>} : vector<1x128xi32>
    %23 = vector.broadcast %21 : i32 to vector<1x128xi32>
    %24 = arith.addi %22, %23 : vector<1x128xi32>
    %c128_i32 = arith.constant 128 : i32
    %25 = vector.broadcast %c128_i32 : i32 to vector<1x128xi32>
    %26 = arith.muli %24, %25 : vector<1x128xi32>
    %27 = tpu.iota {dimensions = array<i32: 1>} : vector<1x128xi32>
    %28 = arith.addi %26, %27 : vector<1x128xi32>
    %c8_i32 = arith.constant 8 : i32
    %29 = vector.broadcast %c8_i32 : i32 to vector<1x128xi32>
    %30 = arith.cmpi slt, %28, %29 : vector<1x128xi32>
    %31 = vector.extract_strided_slice %0 {offsets = [0, 0, 0], sizes = [1, 1, 128], strides = [1, 1, 1]} : vector<2x1x128xf32> to vector<1x1x128xf32>
    %32 = vector.shape_cast %31 : vector<1x1x128xf32> to vector<1x128xf32>
    %33 = vector.extract_strided_slice %0 {offsets = [1, 0, 0], sizes = [1, 1, 128], strides = [1, 1, 1]} : vector<2x1x128xf32> to vector<1x1x128xf32>
    %34 = vector.shape_cast %33 : vector<1x1x128xf32> to vector<1x128xf32>
    %35 = arith.maximumf %32, %34 : vector<1x128xf32>
    %36 = vector.extract_strided_slice %0 {offsets = [0, 0, 0], sizes = [1, 1, 128], strides = [1, 1, 1]} : vector<2x1x128xf32> to vector<1x1x128xf32>
    %37 = vector.shape_cast %36 : vector<1x1x128xf32> to vector<1x128xf32>
    %38 = arith.subf %37, %35 : vector<1x128xf32>
    %39 = math.exp %38 : vector<1x128xf32>
    %40 = vector.extract_strided_slice %0 {offsets = [1, 0, 0], sizes = [1, 1, 128], strides = [1, 1, 1]} : vector<2x1x128xf32> to vector<1x1x128xf32>
    %41 = vector.shape_cast %40 : vector<1x1x128xf32> to vector<1x128xf32>
    %42 = arith.subf %41, %35 : vector<1x128xf32>
    %43 = math.exp %42 : vector<1x128xf32>
    %44 = arith.addf %39, %43 : vector<1x128xf32>
    %45 = arith.subf %17, %35 : vector<1x128xf32>
    %46 = math.log %44 : vector<1x128xf32>
    %47 = arith.subf %45, %46 : vector<1x128xf32>
    %48 = math.exp %47 : vector<1x128xf32>
    %cst_7 = arith.constant 1.000000e+00 : f32
    %49 = vector.broadcast %cst_7 : f32 to vector<1x128xf32>
    %50 = arith.subf %49, %48 : vector<1x128xf32>
    %cst_8 = arith.constant 0.000000e+00 : f32
    %51 = vector.broadcast %cst_8 : f32 to vector<1x128xf32>
    %52 = arith.maximumf %50, %51 : vector<1x128xf32>
    %53 = arith.mulf %52, %52 : vector<1x128xf32>
    %54 = arith.mulf %20, %53 : vector<1x128xf32>
    %cst_9 = arith.constant 0.000000e+00 : f32
    %55 = vector.broadcast %cst_9 : f32 to vector<1x128xf32>
    %56 = arith.subf %55, %54 : vector<1x128xf32>
    %57 = arith.mulf %56, %47 : vector<1x128xf32>
    %cst_10 = arith.constant 0.000000e+00 : f32
    %58 = vector.broadcast %cst_10 : f32 to vector<1x128xf32>
    %59 = arith.select %30, %57, %58 : vector<1x128xi1>, vector<1x128xf32>
    %cst_11 = arith.constant dense<0.000000e+00> : vector<128xf32>
    %60 = vector.multi_reduction <add>, %59, %cst_11 [0] : vector<1x128xf32> to vector<128xf32>
    %61 = vector.shape_cast %60 : vector<128xf32> to vector<1x128xf32>
    %c0_12 = arith.constant 0 : index
    %c0_13 = arith.constant 0 : index
    %62 = vector.load %arg4[%c0_12, %c0_13] : memref<1x128xf32, #tpu.memory_space<vmem>>, vector<1x128xf32>
    tpu.vector_store %arg4[%c0_12, %c0_13], %61 {strides = array<i32>} : memref<1x128xf32, #tpu.memory_space<vmem>>, vector<1x128xf32>,
    return
  }
  func.func @transform_0(%arg0: i32) -> i32 {
    %c0_i32 = arith.constant 0 : i32
    %c0_i32_0 = arith.constant 0 : i32
    return %c0_i32 : i32
  }
  func.func @transform_1(%arg0: i32) -> (i32, i32, i32) {
    %c0_i32 = arith.constant 0 : i32
    %c0_i32_0 = arith.constant 0 : i32
    %c0_i32_1 = arith.constant 0 : i32
    return %c0_i32, %arg0, %c0_i32_0 : i32, i32, i32
  }
  func.func @transform_2(%arg0: i32) -> (i32, i32) {
    %c0_i32 = arith.constant 0 : i32
    %c0_i32_0 = arith.constant 0 : i32
    return %arg0, %c0_i32 : i32, i32
  }
  func.func @transform_3(%arg0: i32) -> (i32, i32) {
    %c0_i32 = arith.constant 0 : i32
    %c0_i32_0 = arith.constant 0 : i32
    return %c0_i32, %arg0 : i32, i32
  }
}

</mosaic_0001>

<llo_original>
// kernel: tpu_custom_call.1
$region0: #{tpu_custom_call.1}
  #allocation0 [shape = 'u32[]', space=smem, size = 0x4, offset = 0x4, fixed_abs, tag = 'smem constant byte address 0x4 - core index']
  #allocation1 [shape = 'u32[144,128]{1,0:T(1,128)}', space=vmem, size = 0x12000, scoped, tag = 'internal scratch']
  %s0 = inlined_call_operand.hbm [shape: f32[2], index: 0, kind: input, shape index: {}]
  %s1 = inlined_call_operand.vmem [shape: f32[2,1,128], index: 1, kind: input, shape index: {}]
  %s2 = inlined_call_operand.vmem [shape: s8[1,128], index: 2, kind: input, shape index: {}]
  %s3 = inlined_call_operand.hbm [shape: f32[1,128], index: 3, kind: output, shape index: {}]
  %s4 = sld [smem:[#allocation0]]
  $region26: #{tpu_custom_call.1} parent=0
    _
  %s6 = ssub.s32 1, %s4
  %s7 = scalar_select 0, %s6, %s4
  $region1: #{tpu_custom_call.1} parent=0
    #allocation2 [shape = 'u8[512]{0}', space=smem, size = 0x200, scoped, tag = 'input window, operand 0, single buffered']
    #allocation3 [shape = 's32[1]{0}', space=sflag, size = 0x4, scoped, tag = 'scoped memory for tpu_custom_call.1']
    #allocation4 [shape = 's32[1]{0}', space=sflag, size = 0x4, scoped, tag = 'scoped memory for tpu_custom_call.1']
    #allocation5 [shape = 'u8[512]{0}', space=vmem, size = 0x400, scoped, tag = 'output window, operand 0, single buffered']
    %8 = vsyncpa [#allocation4], 0
    %9 = vsyncpa [#allocation3], 0
    // Predicated region
    $region2: #{tpu_custom_call.1} parent=1 // pred_check
      _
    $region3: #{tpu_custom_call.1} parent=1 // pred_check_branch
      %11 = sbr.rel (0) target = $region5
    $region4: #{tpu_custom_call.1} parent=1 // pred_region
      %s13 = ssub.s32 16, 16
      %14 = vsyncadd [#allocation4], %s13
      %17 = dma.hbm_to_smem %s0, 16, [#allocation2], [#allocation4]
    $region5: #{tpu_custom_call.1} parent=1 // pred_fallthru
      _
    // Predicated region
    $region6: #{tpu_custom_call.1} parent=1 // pred_check
      _
    $region7: #{tpu_custom_call.1} parent=1 // pred_check_branch
      %19 = sbr.rel (0) target = $region9
    $region8: #{tpu_custom_call.1} parent=1 // pred_region
      _
    $region9: #{tpu_custom_call.1} parent=1 // pred_fallthru
      _
    // Predicated region
    $region10: #{tpu_custom_call.1} parent=1 // pred_check
      _
    $region11: #{tpu_custom_call.1} parent=1 // pred_check_branch
      %21 = sbr.rel (0) target = $region13
    $region12: #{tpu_custom_call.1} parent=1 // pred_region
      _
    $region13: #{tpu_custom_call.1} parent=1 // pred_fallthru
      _
    // Predicated region
    $region14: #{tpu_custom_call.1} parent=1 // pred_check
      _
    $region15: #{tpu_custom_call.1} parent=1 // pred_check_branch
      %23 = sbr.rel (0) target = $region17
    $region16: #{tpu_custom_call.1} parent=1 // pred_region
      %24 = dma.done [#allocation4], 16
    $region17: #{tpu_custom_call.1} parent=1 // pred_fallthru
      _
    %25 = sfence
    %v26 = vld [vmem:[%s1] sm:$0x1]
    %v27 = vld [vmem:[%s1 + $0x1] sm:$0x1]
    %v28 = vld [vmem:[%s2] sm:$0x1]
    %v29 = vunpack.c.0.s8 %v28
    %vm30 = vcmp.eq.s32.totalorder %v29, 0
    %v31 = vsel %vm30, %v26, 0.0
    %s32 = sld [smem:[#allocation2]]
    %v33 = vstv %s32
    %v34 = vsel %vm30, %v33, 0.0
    %vm35 = vcmp.eq.s32.totalorder %v29, 1
    %v36 = vsel %vm35, %v27, %v31
    %s37 = sld [smem:[#allocation2 + $0x1]]
    %v38 = vstv %s37
    %v39 = vsel %vm35, %v38, %v34
    %v40 = vlaneseq
    %v41 = vshrl.u32 %v40, 7
    %v42 = vstv 0
    %v43 = vadd.s32 %v41, %v42
    %v44 = vmul.u32 %v43, 128
    %v45 = vlaneseq
    %v46 = vand.u32 %v45, 127
    %v47 = vadd.s32 %v44, %v46
    %vm48 = vcmp.lt.s32.totalorder %v47, 8
    %v49 = vmax.f32 %v26, %v27
    %v50 = vsub.f32 %v26, %v49
    %v51 = vmul.f32 %v50, 1.442695
    %v52 = vpow.pop %v51
    %v53 = vsub.f32 %v27, %v49
    %v54 = vmul.f32 %v53, 1.442695
    %v55 = vpow.pop %v54
    %v56 = vadd.f32 %v52, %v55
    %v57 = vsub.f32 %v36, %v49
    %v58 = vlog2.pop %v56
    %v59 = vmul.f32 %v58, 0.6931472
    %v60 = vsub.f32 %v57, %v59
    %v61 = vmul.f32 %v60, 1.442695
    %v62 = vpow.pop %v61
    %v63 = vsub.f32 1.0, %v62
    %v64 = vmax.f32 %v63, 0.0
    %v65 = vmul.f32 %v64, %v64
    %v66 = vmul.f32 %v39, %v65
    %v67 = vsub.f32 0.0, %v66
    %v68 = vmul.f32 %v67, %v60
    %v69 = vsel %vm48, %v68, 0.0
    %v70 = vadd.f32 %v69, 0.0
    %71 = vst [vmem:[#allocation5] sm:$0x1] %v70
    // Predicated region
    $region18: #{tpu_custom_call.1} parent=1 // pred_check
      _
    $region19: #{tpu_custom_call.1} parent=1 // pred_check_branch
      %73 = sbr.rel (0) target = $region21
    $region20: #{tpu_custom_call.1} parent=1 // pred_region
      %s75 = ssub.s32 16, 16
      %76 = vsyncadd [#allocation3], %s75
      %s78 = sshll.u32 [#allocation5], 4
      %s79 = int_to_ptr.vmem [resolvable:$true] %s78
      %81 = dma.vmem_to_hbm [thread:$0]  %s79, 16, %s3, [#allocation3]
    $region21: #{tpu_custom_call.1} parent=1 // pred_fallthru
      _
    // Predicated region
    $region22: #{tpu_custom_call.1} parent=1 // pred_check
      _
    $region23: #{tpu_custom_call.1} parent=1 // pred_check_branch
      %83 = sbr.rel (0) target = $region25
    $region24: #{tpu_custom_call.1} parent=1 // pred_region
      %84 = dma.done [#allocation3], 16
    $region25: #{tpu_custom_call.1} parent=1 // pred_fallthru
      _
    %85 = vsyncpa [#allocation3], 1
    %86 = vsyncpa [#allocation4], 1

</llo_original>
